<compile_context>
chip_gen: v5e
topology: v5e:2x2
jax: 0.10.0
libtpu: 0.0.40
codegen_flags: <defaults>
</compile_context>

<pallas_src>
import functools

import jax
import jax.numpy as jnp
from jax.experimental import pallas as pl
from jax.experimental.pallas import tpu as pltpu


def _round_up(x, m):
    return (x + m - 1) // m * m


def _cubenorm_kernel(x_ref, o_ref, *, inv_n, inv_nm1, eps, d_valid, d_pad):
    # x_ref / o_ref: (TB, D_pad) tile -- TB samples (rows) per grid step.
    x = x_ref[...].astype(jnp.float32)

    # Per-row mean. Padded lanes (if any) are zero, so the sum is unaffected;
    # divide by the true element count via a precomputed reciprocal.
    mean = jnp.sum(x, axis=-1, keepdims=True) * inv_n
    diff = x - mean

    if d_pad != d_valid:
        # Mask padded lanes out of the variance accumulation.
        lane = jax.lax.broadcasted_iota(jnp.int32, x.shape, dimension=1)
        diff_sq = jnp.where(lane < d_valid, diff * diff, 0.0)
    else:
        diff_sq = diff * diff

    # torch.var default is unbiased (divide by N-1).
    var = jnp.sum(diff_sq, axis=-1, keepdims=True) * inv_nm1
    inv_std = jax.lax.rsqrt(var + eps)  # EUP slot, free relative to the VPU.
    o_ref[...] = (diff * inv_std).astype(o_ref.dtype)


def cube_norm(x, eps=1e-05):
    """x: (B, C, H, W) array. Returns normalized array of same shape/dtype."""
    B, C, H, W = x.shape
    D = C * H * W
    D_pad = _round_up(D, 128)          # lane-dense, unmasked loads/stores

    in_bytes = x.dtype.itemsize
    out_bytes = in_bytes

    # VMEM per row: double-buffered input + double-buffered output tiles plus
    # ~2x f32 intermediates live during compute.
    bytes_per_row = D_pad * (2 * in_bytes + 2 * out_bytes + 2 * 4)
    vmem_budget = 32 * 1024 * 1024     # conservative: fits v7x (64 MiB physical)

    tb = max(8, (vmem_budget // bytes_per_row) // 8 * 8)
    tb = min(tb, 256)                  # big enough to amortize per-step overhead
    tb = min(tb, _round_up(B, 8))      # don't tile wider than the (padded) batch
    # TODO(synk): for D so large that even TB=8 exceeds VMEM, add a second
    # ("arbitrary") grid axis over D with a two-phase sum / normalize pass.

    B_pad = _round_up(B, tb)

    x2d = x.reshape(B, D)
    if B_pad != B or D_pad != D:
        x2d = jnp.pad(x2d, ((0, B_pad - B), (0, D_pad - D)))

    # Unbiased variance divisor; D == 1 mirrors torch's NaN result.
    inv_nm1 = 1.0 / (D - 1) if D > 1 else float("nan")

    kernel = functools.partial(
        _cubenorm_kernel,
        inv_n=1.0 / D,
        inv_nm1=inv_nm1,
        eps=float(eps),
        d_valid=D,
        d_pad=D_pad,
    )

    vmem_needed = tb * bytes_per_row
    vmem_limit = max(vmem_needed + (1 << 20), 16 << 20)
    vmem_limit = min(vmem_limit, 48 << 20)   # headroom on v7x's 64 MiB VMEM

    grid = (B_pad // tb,)

    out2d = pl.pallas_call(
        kernel,
        out_shape=jax.ShapeDtypeStruct((B_pad, D_pad), x.dtype),
        grid_spec=pltpu.PrefetchScalarGridSpec(
            num_scalar_prefetch=0,
            grid=grid,
            in_specs=[pl.BlockSpec((tb, D_pad), lambda b: (b, 0))],
            out_specs=pl.BlockSpec((tb, D_pad), lambda b: (b, 0)),
        ),
        compiler_params=pltpu.CompilerParams(
            dimension_semantics=("parallel",),
            vmem_limit_bytes=int(vmem_limit),
        ),
        cost_estimate=pl.CostEstimate(
            flops=5 * B * D,
            transcendentals=B,
            bytes_accessed=2 * B * D * in_bytes,
        ),
    )(x2d)

    return out2d[:B, :D].reshape(B, C, H, W)


def cube_norm_ref(x, eps=1e-05):
    """Pure-JAX reference mirroring the PyTorch forward."""
    xf = x.astype(jnp.float32)
    mean = jnp.mean(xf, axis=(1, 2, 3), keepdims=True)
    var = jnp.var(xf, axis=(1, 2, 3), keepdims=True, ddof=1)  # unbiased
    return ((xf - mean) / jnp.sqrt(var + eps)).astype(x.dtype)


if __name__ == "__main__":
    key = jax.random.PRNGKey(0)
    x = jax.random.normal(key, (2, 4, 16, 16), dtype=jnp.float32) * 3.0 + 1.5

    out = cube_norm(x, eps=1e-05)
    out = jax.block_until_ready(out)

    ref = cube_norm_ref(x, eps=1e-05)
    assert out.shape == x.shape and out.dtype == x.dtype
    assert jnp.allclose(out, ref, atol=1e-5, rtol=1e-5), float(
        jnp.max(jnp.abs(out - ref))
    )

    print("KERNEL_OK")
</pallas_src>

<mosaic_0001>
module attributes {stable_mosaic.version = 11 : i64} {
  func.func @_cubenorm_kernel(%arg0: i32, %arg1: memref<8x1024xf32, #tpu.memory_space<vmem>>, %arg2: memref<8x1024xf32, #tpu.memory_space<vmem>>) attributes {dimension_semantics = [#tpu.dimension_semantics<parallel>], iteration_bounds = array<i64: 1>, scalar_prefetch = 0 : i64, scratch_operands = 0 : i64, tpu.core_type = #tpu.core_type<tc>, window_params = [{transform_indices = @transform_0, window_bounds = array<i64: 8, 1024>}, {transform_indices = @transform_1, window_bounds = array<i64: 8, 1024>}]} {
    %c0 = arith.constant 0 : index
    %c0_0 = arith.constant 0 : index
    %0 = vector.load %arg1[%c0, %c0_0] : memref<8x1024xf32, #tpu.memory_space<vmem>>, vector<8x1024xf32>
    %cst = arith.constant dense<0.000000e+00> : vector<8xf32>
    %1 = vector.multi_reduction <add>, %0, %cst [1] : vector<8x1024xf32> to vector<8xf32>
    %2 = vector.shape_cast %1 : vector<8xf32> to vector<8x1xf32>
    %cst_1 = arith.constant 9.765625E-4 : f32
    %3 = vector.broadcast %cst_1 : f32 to vector<8x1xf32>
    %4 = arith.mulf %2, %3 : vector<8x1xf32>
    %5 = vector.broadcast %4 : vector<8x1xf32> to vector<8x1024xf32>
    %6 = arith.subf %0, %5 : vector<8x1024xf32>
    %7 = arith.mulf %6, %6 : vector<8x1024xf32>
    %cst_2 = arith.constant dense<0.000000e+00> : vector<8xf32>
    %8 = vector.multi_reduction <add>, %7, %cst_2 [1] : vector<8x1024xf32> to vector<8xf32>
    %9 = vector.shape_cast %8 : vector<8xf32> to vector<8x1xf32>
    %cst_3 = arith.constant 9.77517105E-4 : f32
    %10 = vector.broadcast %cst_3 : f32 to vector<8x1xf32>
    %11 = arith.mulf %9, %10 : vector<8x1xf32>
    %cst_4 = arith.constant 9.99999974E-6 : f32
    %12 = vector.broadcast %cst_4 : f32 to vector<8x1xf32>
    %13 = arith.addf %11, %12 : vector<8x1xf32>
    %14 = math.rsqrt %13 : vector<8x1xf32>
    %15 = vector.broadcast %14 : vector<8x1xf32> to vector<8x1024xf32>
    %16 = arith.mulf %6, %15 : vector<8x1024xf32>
    %c0_5 = arith.constant 0 : index
    %c0_6 = arith.constant 0 : index
    %17 = vector.load %arg2[%c0_5, %c0_6] : memref<8x1024xf32, #tpu.memory_space<vmem>>, vector<8x1024xf32>
    tpu.vector_store %arg2[%c0_5, %c0_6], %16 {strides = array<i32>} : memref<8x1024xf32, #tpu.memory_space<vmem>>, vector<8x1024xf32>,
    return
  }
  func.func @transform_0(%arg0: i32) -> (i32, i32) {
    %c0_i32 = arith.constant 0 : i32
    %c0_i32_0 = arith.constant 0 : i32
    return %arg0, %c0_i32 : i32, i32
  }
  func.func @transform_1(%arg0: i32) -> (i32, i32) {
    %c0_i32 = arith.constant 0 : i32
    %c0_i32_0 = arith.constant 0 : i32
    return %arg0, %c0_i32 : i32, i32
  }
}

</mosaic_0001>

<llo_original>
// kernel: tpu_custom_call.1
$region0: #{tpu_custom_call.1}
  #allocation0 [shape = 'u32[]', space=smem, size = 0x4, offset = 0x4, fixed_abs, tag = 'smem constant byte address 0x4 - core index']
  #allocation1 [shape = 'u32[72,128]{1,0:T(1,128)}', space=vmem, size = 0x9000, scoped, tag = 'internal scratch']
  %s0 = inlined_call_operand.hbm [shape: f32[8,1024], index: 0, kind: input, shape index: {}]
  %s1 = inlined_call_operand.hbm [shape: f32[8,1024], index: 1, kind: output, shape index: {}]
  %s2 = sld [smem:[#allocation0]]
  $region18: #{tpu_custom_call.1} parent=0
    _
  %s4 = ssub.s32 1, %s2
  %s5 = scalar_select 0, %s4, %s2
  $region1: #{tpu_custom_call.1} parent=0
    #allocation2 [shape = 'u8[32768]{0}', space=vmem, size = 0x8000, scoped, tag = 'input window, operand 0, single buffered']
    #allocation3 [shape = 's32[1]{0}', space=sflag, size = 0x4, scoped, tag = 'scoped memory for tpu_custom_call.1']
    #allocation4 [shape = 's32[1]{0}', space=sflag, size = 0x4, scoped, tag = 'scoped memory for tpu_custom_call.1']
    #allocation5 [shape = 'u8[32768]{0}', space=vmem, size = 0x8000, scoped, tag = 'output window, operand 0, single buffered']
    %6 = vsyncpa [#allocation3], 0
    %7 = vsyncpa [#allocation4], 0
    // Predicated region
    $region2: #{tpu_custom_call.1} parent=1 // pred_check
      _
    $region3: #{tpu_custom_call.1} parent=1 // pred_check_branch
      %9 = sbr.rel (0) target = $region5
    $region4: #{tpu_custom_call.1} parent=1 // pred_region
      %11 = vsyncadd [#allocation3], 0
      %s13 = sshll.u32 %s0, 4
      %s14 = int_to_ptr.hbm [resolvable:$true] %s13
      %s15 = sshll.u32 [#allocation2], 4
      %s16 = int_to_ptr.vmem [resolvable:$true] %s15
      %18 = dma.hbm_to_vmem [thread:$0]  %s14, 1024, %s16, [#allocation3]
    $region5: #{tpu_custom_call.1} parent=1 // pred_fallthru
      _
    // Predicated region
    $region6: #{tpu_custom_call.1} parent=1 // pred_check
      _
    $region7: #{tpu_custom_call.1} parent=1 // pred_check_branch
      %20 = sbr.rel (0) target = $region9
    $region8: #{tpu_custom_call.1} parent=1 // pred_region
      %22 = dma.done [#allocation3], 1024
    $region9: #{tpu_custom_call.1} parent=1 // pred_fallthru
      _
    %v23 = vld [vmem:[#allocation2] sm:$0xff]
    %v24 = vld [vmem:[#allocation2 + $0x8] sm:$0xff]
    %v25 = vld [vmem:[#allocation2 + $0x10] sm:$0xff]
    %v26 = vld [vmem:[#allocation2 + $0x18] sm:$0xff]
    %v27 = vld [vmem:[#allocation2 + $0x20] sm:$0xff]
    %v28 = vld [vmem:[#allocation2 + $0x28] sm:$0xff]
    %v29 = vld [vmem:[#allocation2 + $0x30] sm:$0xff]
    %v30 = vld [vmem:[#allocation2 + $0x38] sm:$0xff]
    %v31 = vadd.f32 %v23, %v24
    %v32 = vadd.f32 %v31, %v25
    %v33 = vadd.f32 %v32, %v26
    %v34 = vadd.f32 %v33, %v27
    %v35 = vadd.f32 %v34, %v28
    %v36 = vadd.f32 %v35, %v29
    %v37 = vadd.f32 %v36, %v30
    %38 = vadd.xlane.f32.xlu0 %v37
    %v39 = vpop.xlane.xlu0 %38
    %v40 = vmul.f32 %v39, 0.0009765625
    %v41 = vsub.f32 %v23, %v40
    %v42 = vsub.f32 %v24, %v40
    %v43 = vsub.f32 %v25, %v40
    %v44 = vsub.f32 %v26, %v40
    %v45 = vsub.f32 %v27, %v40
    %v46 = vsub.f32 %v28, %v40
    %v47 = vsub.f32 %v29, %v40
    %v48 = vsub.f32 %v30, %v40
    %v49 = vmul.f32 %v41, %v41
    %v50 = vmul.f32 %v42, %v42
    %v51 = vmul.f32 %v43, %v43
    %v52 = vmul.f32 %v44, %v44
    %v53 = vmul.f32 %v45, %v45
    %v54 = vmul.f32 %v46, %v46
    %v55 = vmul.f32 %v47, %v47
    %v56 = vmul.f32 %v48, %v48
    %v57 = vadd.f32 %v49, %v50
    %v58 = vadd.f32 %v57, %v51
    %v59 = vadd.f32 %v58, %v52
    %v60 = vadd.f32 %v59, %v53
    %v61 = vadd.f32 %v60, %v54
    %v62 = vadd.f32 %v61, %v55
    %v63 = vadd.f32 %v62, %v56
    %64 = vadd.xlane.f32.xlu0 %v63
    %v65 = vpop.xlane.xlu0 %64
    %v66 = vmul.f32 %v65, 0.0009775171
    %v67 = vadd.f32 %v66, 1e-05
    %v68 = vrsqrt.pop %v67
    %v69 = vmul.f32 %v68, %v67
    %v70 = vmul.f32 %v69, %v68
    %v71 = vmul.f32 0.5, %v70
    %v72 = vsub.f32 1.5, %v71
    %v73 = vmul.f32 %v68, %v72
    %vm74 = vweird.f32 %v67
    %vm75 = vweird.f32 %v68
    %vm76 = vmor %vm74, %vm75
    %v77 = vsel %vm76, %v68, %v73
    %v78 = vmul.f32 %v41, %v77
    %v79 = vmul.f32 %v42, %v77
    %v80 = vmul.f32 %v43, %v77
    %v81 = vmul.f32 %v44, %v77
    %v82 = vmul.f32 %v45, %v77
    %v83 = vmul.f32 %v46, %v77
    %v84 = vmul.f32 %v47, %v77
    %v85 = vmul.f32 %v48, %v77
    %86 = vst [vmem:[#allocation5] sm:$0xff] %v78
    %87 = vst [vmem:[#allocation5 + $0x8] sm:$0xff] %v79
    %88 = vst [vmem:[#allocation5 + $0x10] sm:$0xff] %v80
    %89 = vst [vmem:[#allocation5 + $0x18] sm:$0xff] %v81
    %90 = vst [vmem:[#allocation5 + $0x20] sm:$0xff] %v82
    %91 = vst [vmem:[#allocation5 + $0x28] sm:$0xff] %v83
    %92 = vst [vmem:[#allocation5 + $0x30] sm:$0xff] %v84
    %93 = vst [vmem:[#allocation5 + $0x38] sm:$0xff] %v85
    // Predicated region
    $region10: #{tpu_custom_call.1} parent=1 // pred_check
      _
    $region11: #{tpu_custom_call.1} parent=1 // pred_check_branch
      %95 = sbr.rel (0) target = $region13
    $region12: #{tpu_custom_call.1} parent=1 // pred_region
      %97 = vsyncadd [#allocation4], 0
      %s99 = sshll.u32 [#allocation5], 4
      %s100 = int_to_ptr.vmem [resolvable:$true] %s99
      %s101 = sshll.u32 %s1, 4
      %s102 = int_to_ptr.hbm [resolvable:$true] %s101
      %104 = dma.vmem_to_hbm [thread:$0]  %s100, 1024, %s102, [#allocation4]
    $region13: #{tpu_custom_call.1} parent=1 // pred_fallthru
      _
    // Predicated region
    $region14: #{tpu_custom_call.1} parent=1 // pred_check
      _
    $region15: #{tpu_custom_call.1} parent=1 // pred_check_branch
      %106 = sbr.rel (0) target = $region17
    $region16: #{tpu_custom_call.1} parent=1 // pred_region
      %108 = dma.done [#allocation4], 1024
    $region17: #{tpu_custom_call.1} parent=1 // pred_fallthru
      _
    %109 = vsyncpa [#allocation3], 1
    %110 = vsyncpa [#allocation4], 1

</llo_original>
